<compile_context>
chip_gen: v7x
topology: tpu7x:2x2x1
jax: 0.10.0
libtpu: 0.0.40
codegen_flags: <defaults>
</compile_context>

<pallas_src>
import jax
import jax.numpy as jnp
from jax import lax
from jax.experimental import pallas as pl
from jax.experimental.pallas import tpu as pltpu

_LANES = 512                     # preferred lane-dense last dim (multiple of 128)
_BLOCK_ELEMS = 2048 * 512        # ~4 MiB per f32 block buffer
_MIN_GRID_STEPS = 4              # keep several steps so v7x megacore can shard


def _round_up(a, m):
    return -(-a // m) * m


def _gelu_kernel(x_ref, o_ref):
    # Exact (erf-based) GELU, matching torch.nn.GELU() default:
    #   gelu(x) = 0.5 * x * (1 + erf(x / sqrt(2)))
    x = x_ref[...].astype(jnp.float32)
    inv_sqrt2 = jnp.float32(0.7071067811865476)
    y = 0.5 * x * (1.0 + lax.erf(x * inv_sqrt2))
    o_ref[...] = y.astype(o_ref.dtype)


def custom_act_gelu(x):
    """Exact GELU elementwise via a tiled, pipelined Pallas TPU kernel.

    Accepts any shape/dtype; internally flattened into a lane-dense
    (rows, lanes) slab, tiled along rows, and reshaped back.
    """
    orig_shape = x.shape
    n = int(x.size)
    if n == 0:
        return x

    flat = x.reshape(-1)

    # Pick a lane-dense width that divides n if possible (no pad / no slice).
    lanes = None
    for cand in (_LANES, 256, 128):
        if n % cand == 0:
            lanes = cand
            break
    if lanes is None:
        lanes = _LANES
        padded_n = _round_up(n, lanes)
        flat = jnp.pad(flat, (0, padded_n - n))   # GELU(0) = 0; tail discarded
    else:
        padded_n = n

    rows = padded_n // lanes
    x2d = flat.reshape(rows, lanes)

    # Rows per block: large enough to amortise per-step overhead, clamped so the
    # grid keeps >= _MIN_GRID_STEPS steps, multiple of 8 sublanes.
    tm_cap = max(8, (_BLOCK_ELEMS // lanes) // 8 * 8)
    if rows <= 8:
        tm = rows                                  # full-extent block is legal
    else:
        tm = min(tm_cap, _round_up(pl.cdiv(rows, _MIN_GRID_STEPS), 8))

    grid = (pl.cdiv(rows, tm),)                    # ragged last block is masked

    itemsize = jnp.dtype(x.dtype).itemsize
    out2d = pl.pallas_call(
        _gelu_kernel,
        out_shape=jax.ShapeDtypeStruct((rows, lanes), x.dtype),
        grid=grid,
        in_specs=[pl.BlockSpec((tm, lanes), lambda i: (i, 0))],
        out_specs=pl.BlockSpec((tm, lanes), lambda i: (i, 0)),
        compiler_params=pltpu.CompilerParams(
            dimension_semantics=("parallel",),
            vmem_limit_bytes=48 << 20,             # fits v5e/v6e/v7x budgets
        ),
        cost_estimate=pl.CostEstimate(
            flops=20 * padded_n,
            transcendentals=padded_n,
            bytes_accessed=2 * padded_n * itemsize,
        ),
    )(x2d)

    out_flat = out2d.reshape(-1)
    if padded_n != n:
        out_flat = out_flat[:n]
    return out_flat.reshape(orig_shape)


if __name__ == "__main__":
    key = jax.random.PRNGKey(0)

    # Small shape consistent with the module's forward (transformer activation).
    # n = 512 -> aligned fast path (no pad, no slice).
    x_small = jax.random.normal(key, (2, 8, 32), dtype=jnp.float32)
    y_small = custom_act_gelu(x_small)
    jax.block_until_ready(y_small)
    y_small_ref = jax.nn.gelu(x_small, approximate=False)
    assert y_small.shape == x_small.shape and y_small.dtype == x_small.dtype
    assert jnp.max(jnp.abs(y_small - y_small_ref)) < 1e-5, "GELU mismatch (small)"

    # Larger, unaligned shape: exercises minimal-pad + ragged-grid path with
    # multiple pipelined grid steps.
    key2 = jax.random.PRNGKey(0)
    x_big = jax.random.normal(key2, (3, 257, 1030), dtype=jnp.float32)
    y_big = custom_act_gelu(x_big)
    jax.block_until_ready(y_big)
    y_big_ref = jax.nn.gelu(x_big, approximate=False)
    assert y_big.shape == x_big.shape and y_big.dtype == x_big.dtype
    assert jnp.max(jnp.abs(y_big - y_big_ref)) < 1e-5, "GELU mismatch (big)"

    print("KERNEL_OK")
</pallas_src>

<mosaic_0001>
module attributes {stable_mosaic.version = 11 : i64} {
  func.func @_gelu_kernel(%arg0: i32, %arg1: memref<1x512xf32, #tpu.memory_space<vmem>>, %arg2: memref<1x512xf32, #tpu.memory_space<vmem>>) attributes {dimension_semantics = [#tpu.dimension_semantics<parallel>], iteration_bounds = array<i64: 1>, scalar_prefetch = 0 : i64, scratch_operands = 0 : i64, tpu.core_type = #tpu.core_type<tc>, window_params = [{transform_indices = @transform_0, window_bounds = array<i64: 1, 512>}, {transform_indices = @transform_1, window_bounds = array<i64: 1, 512>}]} {
    %c0 = arith.constant 0 : index
    %c0_0 = arith.constant 0 : index
    %0 = vector.load %arg1[%c0, %c0_0] : memref<1x512xf32, #tpu.memory_space<vmem>>, vector<1x512xf32>
    %cst = arith.constant 5.000000e-01 : f32
    %1 = vector.broadcast %cst : f32 to vector<1x512xf32>
    %2 = arith.mulf %1, %0 : vector<1x512xf32>
    %cst_1 = arith.constant 0.707106769 : f32
    %3 = vector.broadcast %cst_1 : f32 to vector<1x512xf32>
    %4 = arith.mulf %0, %3 : vector<1x512xf32>
    %5 = math.erf %4 : vector<1x512xf32>
    %cst_2 = arith.constant 1.000000e+00 : f32
    %6 = vector.broadcast %cst_2 : f32 to vector<1x512xf32>
    %7 = arith.addf %6, %5 : vector<1x512xf32>
    %8 = arith.mulf %2, %7 : vector<1x512xf32>
    %c0_3 = arith.constant 0 : index
    %c0_4 = arith.constant 0 : index
    %9 = vector.load %arg2[%c0_3, %c0_4] : memref<1x512xf32, #tpu.memory_space<vmem>>, vector<1x512xf32>
    tpu.vector_store %arg2[%c0_3, %c0_4], %8 {strides = array<i32>} : memref<1x512xf32, #tpu.memory_space<vmem>>, vector<1x512xf32>,
    return
  }
  func.func @transform_0(%arg0: i32) -> (i32, i32) {
    %c0_i32 = arith.constant 0 : i32
    %c0_i32_0 = arith.constant 0 : i32
    return %arg0, %c0_i32 : i32, i32
  }
  func.func @transform_1(%arg0: i32) -> (i32, i32) {
    %c0_i32 = arith.constant 0 : i32
    %c0_i32_0 = arith.constant 0 : i32
    return %arg0, %c0_i32 : i32, i32
  }
}

</mosaic_0001>

<llo_original>
// kernel: tpu_custom_call.1
$region0: #{tpu_custom_call.1}
  #allocation0 [shape = 'u32[]', space=smem, size = 0x4, offset = 0x4, fixed_abs, tag = 'smem constant byte address 0x4 - core index']
  #allocation1 [shape = 'u32[144,128]{1,0:T(1,128)}', space=vmem, size = 0x12000, scoped, tag = 'internal scratch']
  %s0 = inlined_call_operand.hbm [shape: f32[1,512], index: 0, kind: input, shape index: {}]
  %s1 = inlined_call_operand.hbm [shape: f32[1,512], index: 1, kind: output, shape index: {}]
  %s2 = sld [smem:[#allocation0]]
  $region18: #{tpu_custom_call.1} parent=0
    _
  %s4 = ssub.s32 1, %s2
  %s5 = scalar_select 0, %s4, %s2
  $region1: #{tpu_custom_call.1} parent=0
    #allocation2 [shape = 'u8[2048]{0}', space=vmem, size = 0x800, scoped, tag = 'input window, operand 0, single buffered']
    #allocation3 [shape = 's32[1]{0}', space=sflag, size = 0x4, scoped, tag = 'scoped memory for tpu_custom_call.1']
    #allocation4 [shape = 's32[1]{0}', space=sflag, size = 0x4, scoped, tag = 'scoped memory for tpu_custom_call.1']
    #allocation5 [shape = 'u8[2048]{0}', space=vmem, size = 0x800, scoped, tag = 'output window, operand 0, single buffered']
    %6 = vsyncpa [#allocation3], 0
    %7 = vsyncpa [#allocation4], 0
    // Predicated region
    $region2: #{tpu_custom_call.1} parent=1 // pred_check
      _
    $region3: #{tpu_custom_call.1} parent=1 // pred_check_branch
      %9 = sbr.rel (0) target = $region5
    $region4: #{tpu_custom_call.1} parent=1 // pred_region
      %s11 = ssub.s32 64, 64
      %12 = vsyncadd [#allocation3], %s11
      %s14 = sshll.u32 [#allocation2], 4
      %s15 = int_to_ptr.vmem [resolvable:$true] %s14
      %17 = dma.hbm_to_vmem [thread:$0]  %s0, 64, %s15, [#allocation3]
    $region5: #{tpu_custom_call.1} parent=1 // pred_fallthru
      _
    // Predicated region
    $region6: #{tpu_custom_call.1} parent=1 // pred_check
      _
    $region7: #{tpu_custom_call.1} parent=1 // pred_check_branch
      %19 = sbr.rel (0) target = $region9
    $region8: #{tpu_custom_call.1} parent=1 // pred_region
      %20 = dma.done [#allocation3], 64
    $region9: #{tpu_custom_call.1} parent=1 // pred_fallthru
      _
    %v21 = vld [vmem:[#allocation2] sm:$0xf]
    %v22 = vmul.f32 %v21, 0.5
    %v23 = vmul.f32 %v21, 0.70710677
    %v24 = verf.f32.pop %v23
    %v25 = vadd.f32 %v24, 1.0
    %v26 = vmul.f32 %v22, %v25
    %v27 = vlaneseq
    %vm28 = vcmp.ge.s32.totalorder %v27, 0
    %vm29 = vcmp.lt.s32.totalorder %v27, 512
    %vm30 = vmand %vm28, %vm29
    %31 = vst.msk [vmem:[#allocation5] sm:$0xf] %vm30, %v26
    // Predicated region
    $region10: #{tpu_custom_call.1} parent=1 // pred_check
      _
    $region11: #{tpu_custom_call.1} parent=1 // pred_check_branch
      %33 = sbr.rel (0) target = $region13
    $region12: #{tpu_custom_call.1} parent=1 // pred_region
      %s35 = ssub.s32 64, 64
      %36 = vsyncadd [#allocation4], %s35
      %s38 = sshll.u32 [#allocation5], 4
      %s39 = int_to_ptr.vmem [resolvable:$true] %s38
      %41 = dma.vmem_to_hbm [thread:$0]  %s39, 64, %s1, [#allocation4]
    $region13: #{tpu_custom_call.1} parent=1 // pred_fallthru
      _
    // Predicated region
    $region14: #{tpu_custom_call.1} parent=1 // pred_check
      _
    $region15: #{tpu_custom_call.1} parent=1 // pred_check_branch
      %43 = sbr.rel (0) target = $region17
    $region16: #{tpu_custom_call.1} parent=1 // pred_region
      %44 = dma.done [#allocation4], 64
    $region17: #{tpu_custom_call.1} parent=1 // pred_fallthru
      _
    %45 = vsyncpa [#allocation3], 1
    %46 = vsyncpa [#allocation4], 1

</llo_original>
